<compile_context>
chip_gen: v6e
topology: v6e:2x2x1
jax: 0.10.0
libtpu: 0.0.40
codegen_flags: <defaults>
</compile_context>

<pallas_src>
import functools

import jax
import jax.numpy as jnp
from jax.experimental import pallas as pl
from jax.experimental.pallas import tpu as pltpu

LOG_STD_MAX = 0.0
LOG_STD_MIN = -20.0

_HIDDEN = 128
_LANE = 128


def _round_up(x, m):
    return ((x + m - 1) // m) * m


def _skill_policy_kernel(
    x_ref,                      # (TB, K_PAD)        bf16
    we_ref, be_ref,             # embed_obs          bf16 / f32
    w1_ref, b1_ref,             # latent_policy 1
    w2_ref, b2_ref,             # latent_policy 2
    w3_ref, b3_ref,             # latent_policy 3
    w4_ref, b4_ref,             # latent_policy 4
    wh_ref, bh_ref,             # fused [mu | log_std] head, (128, 2*LD_PAD)
    eps_ref,                    # (TB, LD_PAD)       f32 standard-normal noise
    sample_ref, mu_ref, std_ref,  # outputs, each (TB, LD_PAD) f32
):
    f32 = jnp.float32
    bf16 = jnp.bfloat16

    # embed_obs: Linear(input_obs, 128), no activation (bf16 MXU, f32 acc).
    h = jnp.dot(x_ref[...], we_ref[...], preferred_element_type=f32) + be_ref[...]

    # latent_policy: 4 x (Linear(128,128) + ReLU).  Elementwise stays f32,
    # cast to bf16 only at the next matmul input.
    for w_ref, b_ref in ((w1_ref, b1_ref), (w2_ref, b2_ref),
                         (w3_ref, b3_ref), (w4_ref, b4_ref)):
        h = jnp.dot(h.astype(bf16), w_ref[...], preferred_element_type=f32) + b_ref[...]
        h = jnp.maximum(h, 0.0)

    # Fused heads: one lane-dense matmul producing [mu_raw | log_std_raw].
    head = jnp.dot(h.astype(bf16), wh_ref[...], preferred_element_type=f32) + bh_ref[...]
    ld_pad = head.shape[-1] // 2

    mu = jnp.tanh(head[:, :ld_pad])
    std = jnp.exp(jnp.clip(head[:, ld_pad:], LOG_STD_MIN, LOG_STD_MAX))

    # Reparameterized sample of Normal(mu, std).
    sample_ref[...] = mu + std * eps_ref[...]
    mu_ref[...] = mu
    std_ref[...] = std


@functools.partial(jax.jit, static_argnames=("latent_dim", "block_batch"))
def skill_policy_forward(data, params, eps, *, latent_dim, block_batch=1024):
    """Runs the SkillPolicy forward pass as a batch-tiled Pallas kernel.

    data   : (B, input_obs) float32
    params : dict of (in, out) weights and (1, out) biases (float32)
    eps    : (B, latent_dim) float32 standard-normal noise for rsample()
    returns: (sample, mu, std), each (B, latent_dim) float32
    """
    f32, bf16 = jnp.float32, jnp.bfloat16
    B, input_obs = data.shape
    H = _HIDDEN
    K_PAD = _round_up(input_obs, _LANE)
    LD_PAD = _round_up(latent_dim, _LANE)

    # Batch tiling: large tiles amortize per-step overhead; keep grid exact by
    # zero-padding B up to a multiple of the tile.
    TB = min(block_batch, _round_up(B, 8))
    B_pad = _round_up(B, TB)
    grid = (B_pad // TB,)

    # --- pack inputs / params into kernel-ready (padded, bf16) layout -------
    x = jnp.pad(data, ((0, B_pad - B), (0, K_PAD - input_obs))).astype(bf16)
    eps_p = jnp.pad(eps, ((0, B_pad - B), (0, LD_PAD - latent_dim)))

    we = jnp.pad(params["we"], ((0, K_PAD - input_obs), (0, 0))).astype(bf16)
    be = params["be"].astype(f32)

    hidden = []
    for i in (1, 2, 3, 4):
        hidden.append(params[f"w{i}"].astype(bf16))
        hidden.append(params[f"b{i}"].astype(f32))

    wmu_p = jnp.pad(params["wmu"], ((0, 0), (0, LD_PAD - latent_dim)))
    wls_p = jnp.pad(params["wls"], ((0, 0), (0, LD_PAD - latent_dim)))
    whead = jnp.concatenate([wmu_p, wls_p], axis=1).astype(bf16)
    bmu_p = jnp.pad(params["bmu"], ((0, 0), (0, LD_PAD - latent_dim)))
    bls_p = jnp.pad(params["bls"], ((0, 0), (0, LD_PAD - latent_dim)))
    bhead = jnp.concatenate([bmu_p, bls_p], axis=1).astype(f32)

    inputs = (x, we, be, *hidden, whead, bhead, eps_p)

    # --- BlockSpecs ---------------------------------------------------------
    def batch_map(i):
        return (i, 0)

    def resident_map(i):
        return (0, 0)

    x_spec = pl.BlockSpec((TB, K_PAD), batch_map)
    eps_spec = pl.BlockSpec((TB, LD_PAD), batch_map)
    out_spec = pl.BlockSpec((TB, LD_PAD), batch_map)

    def w_spec(shape):
        return pl.BlockSpec(shape, resident_map)

    in_specs = [
        x_spec,
        w_spec((K_PAD, H)), w_spec((1, H)),
        w_spec((H, H)), w_spec((1, H)),
        w_spec((H, H)), w_spec((1, H)),
        w_spec((H, H)), w_spec((1, H)),
        w_spec((H, H)), w_spec((1, H)),
        w_spec((H, 2 * LD_PAD)), w_spec((1, 2 * LD_PAD)),
        eps_spec,
    ]

    out_shape = jax.ShapeDtypeStruct((B_pad, LD_PAD), f32)

    sample_p, mu_p, std_p = pl.pallas_call(
        _skill_policy_kernel,
        out_shape=(out_shape, out_shape, out_shape),
        grid=grid,
        in_specs=in_specs,
        out_specs=(out_spec, out_spec, out_spec),
        compiler_params=pltpu.CompilerParams(
            dimension_semantics=("parallel",),
            vmem_limit_bytes=48 * 1024 * 1024,
        ),
    )(*inputs)

    # Slice padded, lane-dense outputs back to the logical shape.
    sample = sample_p[:B, :latent_dim]
    mu = mu_p[:B, :latent_dim]
    std = std_p[:B, :latent_dim]
    return sample, mu, std


def _init_linear(key, fan_in, fan_out):
    """Deterministic PyTorch-style uniform init; weight returned as (in, out)."""
    kw, kb = jax.random.split(key)
    bound = 1.0 / jnp.sqrt(fan_in)
    w = jax.random.uniform(kw, (fan_in, fan_out), jnp.float32, -bound, bound)
    b = jax.random.uniform(kb, (1, fan_out), jnp.float32, -bound, bound)
    return w, b


def make_params(key, input_obs, latent_dim, hidden=_HIDDEN):
    keys = jax.random.split(key, 7)
    p = {}
    p["we"], p["be"] = _init_linear(keys[0], input_obs, hidden)
    p["w1"], p["b1"] = _init_linear(keys[1], hidden, hidden)
    p["w2"], p["b2"] = _init_linear(keys[2], hidden, hidden)
    p["w3"], p["b3"] = _init_linear(keys[3], hidden, hidden)
    p["w4"], p["b4"] = _init_linear(keys[4], hidden, hidden)
    p["wmu"], p["bmu"] = _init_linear(keys[5], hidden, latent_dim)
    p["wls"], p["bls"] = _init_linear(keys[6], hidden, latent_dim)
    return p


def reference_forward(data, params, eps):
    """Pure-JAX reference mirroring the kernel numerics (bf16 matmul, f32 acc)."""
    bf16, f32 = jnp.bfloat16, jnp.float32

    def lin(h, w, b):
        return jnp.dot(h.astype(bf16), w.astype(bf16),
                       preferred_element_type=f32) + b

    h = lin(data, params["we"], params["be"])
    for i in (1, 2, 3, 4):
        h = jnp.maximum(lin(h, params[f"w{i}"], params[f"b{i}"]), 0.0)
    mu = jnp.tanh(lin(h, params["wmu"], params["bmu"]))
    log_std = lin(h, params["wls"], params["bls"])
    std = jnp.exp(jnp.clip(log_std, LOG_STD_MIN, LOG_STD_MAX))
    return mu + std * eps, mu, std


if __name__ == "__main__":
    input_obs = 32
    latent_dim = 8
    batch = 4

    key = jax.random.PRNGKey(0)
    k_params, k_data, k_eps = jax.random.split(key, 3)

    params = make_params(k_params, input_obs, latent_dim)
    data = jax.random.normal(k_data, (batch, input_obs), jnp.float32)
    eps = jax.random.normal(k_eps, (batch, latent_dim), jnp.float32)

    sample, mu, std = skill_policy_forward(data, params, eps, latent_dim=latent_dim)
    jax.block_until_ready((sample, mu, std))

    # Correctness check against the pure-JAX reference (same bf16/f32 numerics).
    ref_sample, ref_mu, ref_std = reference_forward(data, params, eps)
    assert jnp.allclose(sample, ref_sample, atol=1e-2, rtol=1e-2)
    assert jnp.allclose(mu, ref_mu, atol=1e-2, rtol=1e-2)
    assert jnp.allclose(std, ref_std, atol=1e-2, rtol=1e-2)

    print("KERNEL_OK")
</pallas_src>

<mosaic_0001>
module attributes {stable_mosaic.version = 11 : i64} {
  func.func @_skill_policy_kernel(%arg0: i32, %arg1: memref<8x128xbf16, #tpu.memory_space<vmem>>, %arg2: memref<128x128xbf16, #tpu.memory_space<vmem>>, %arg3: memref<1x128xf32, #tpu.memory_space<vmem>>, %arg4: memref<128x128xbf16, #tpu.memory_space<vmem>>, %arg5: memref<1x128xf32, #tpu.memory_space<vmem>>, %arg6: memref<128x128xbf16, #tpu.memory_space<vmem>>, %arg7: memref<1x128xf32, #tpu.memory_space<vmem>>, %arg8: memref<128x128xbf16, #tpu.memory_space<vmem>>, %arg9: memref<1x128xf32, #tpu.memory_space<vmem>>, %arg10: memref<128x128xbf16, #tpu.memory_space<vmem>>, %arg11: memref<1x128xf32, #tpu.memory_space<vmem>>, %arg12: memref<128x256xbf16, #tpu.memory_space<vmem>>, %arg13: memref<1x256xf32, #tpu.memory_space<vmem>>, %arg14: memref<8x128xf32, #tpu.memory_space<vmem>>, %arg15: memref<8x128xf32, #tpu.memory_space<vmem>>, %arg16: memref<8x128xf32, #tpu.memory_space<vmem>>, %arg17: memref<8x128xf32, #tpu.memory_space<vmem>>) attributes {dimension_semantics = [#tpu.dimension_semantics<parallel>], iteration_bounds = array<i64: 1>, scalar_prefetch = 0 : i64, scratch_operands = 0 : i64, tpu.core_type = #tpu.core_type<tc>, window_params = [{transform_indices = @transform_0, window_bounds = array<i64: 8, 128>}, {pipeline_mode = #tpu.pipeline_mode<synchronous>, transform_indices = @transform_1, window_bounds = array<i64: 128, 128>}, {pipeline_mode = #tpu.pipeline_mode<synchronous>, transform_indices = @transform_2, window_bounds = array<i64: 1, 128>}, {pipeline_mode = #tpu.pipeline_mode<synchronous>, transform_indices = @transform_3, window_bounds = array<i64: 128, 128>}, {pipeline_mode = #tpu.pipeline_mode<synchronous>, transform_indices = @transform_4, window_bounds = array<i64: 1, 128>}, {pipeline_mode = #tpu.pipeline_mode<synchronous>, transform_indices = @transform_5, window_bounds = array<i64: 128, 128>}, {pipeline_mode = #tpu.pipeline_mode<synchronous>, transform_indices = @transform_6, window_bounds = array<i64: 1, 128>}, {pipeline_mode = #tpu.pipeline_mode<synchronous>, transform_indices = @transform_7, window_bounds = array<i64: 128, 128>}, {pipeline_mode = #tpu.pipeline_mode<synchronous>, transform_indices = @transform_8, window_bounds = array<i64: 1, 128>}, {pipeline_mode = #tpu.pipeline_mode<synchronous>, transform_indices = @transform_9, window_bounds = array<i64: 128, 128>}, {pipeline_mode = #tpu.pipeline_mode<synchronous>, transform_indices = @transform_10, window_bounds = array<i64: 1, 128>}, {pipeline_mode = #tpu.pipeline_mode<synchronous>, transform_indices = @transform_11, window_bounds = array<i64: 128, 256>}, {pipeline_mode = #tpu.pipeline_mode<synchronous>, transform_indices = @transform_12, window_bounds = array<i64: 1, 256>}, {transform_indices = @transform_13, window_bounds = array<i64: 8, 128>}, {transform_indices = @transform_14, window_bounds = array<i64: 8, 128>}, {transform_indices = @transform_15, window_bounds = array<i64: 8, 128>}, {transform_indices = @transform_16, window_bounds = array<i64: 8, 128>}]} {
    %c0 = arith.constant 0 : index
    %c0_0 = arith.constant 0 : index
    %0 = vector.load %arg1[%c0, %c0_0] : memref<8x128xbf16, #tpu.memory_space<vmem>>, vector<8x128xbf16>
    %c0_1 = arith.constant 0 : index
    %c0_2 = arith.constant 0 : index
    %1 = vector.load %arg2[%c0_1, %c0_2] : memref<128x128xbf16, #tpu.memory_space<vmem>>, vector<128x128xbf16>
    %cst = arith.constant dense<0.000000e+00> : vector<8x128xf32>
    %2 = tpu.matmul %0, %1, %cst {dimension_numbers = #tpu.dot_dimension_numbers<[1], [0], [0], [1], [0, 0, 1, 1], [], []>} : vector<8x128xbf16>, vector<128x128xbf16>, vector<8x128xf32> -> vector<8x128xf32>
    %c0_3 = arith.constant 0 : index
    %c0_4 = arith.constant 0 : index
    %3 = vector.load %arg3[%c0_3, %c0_4] : memref<1x128xf32, #tpu.memory_space<vmem>>, vector<1x128xf32>
    %4 = vector.broadcast %3 : vector<1x128xf32> to vector<8x128xf32>
    %5 = arith.addf %2, %4 : vector<8x128xf32>
    %6 = arith.truncf %5 : vector<8x128xf32> to vector<8x128xbf16>
    %c0_5 = arith.constant 0 : index
    %c0_6 = arith.constant 0 : index
    %7 = vector.load %arg4[%c0_5, %c0_6] : memref<128x128xbf16, #tpu.memory_space<vmem>>, vector<128x128xbf16>
    %cst_7 = arith.constant dense<0.000000e+00> : vector<8x128xf32>
    %8 = tpu.matmul %6, %7, %cst_7 {dimension_numbers = #tpu.dot_dimension_numbers<[1], [0], [0], [1], [0, 0, 1, 1], [], []>} : vector<8x128xbf16>, vector<128x128xbf16>, vector<8x128xf32> -> vector<8x128xf32>
    %c0_8 = arith.constant 0 : index
    %c0_9 = arith.constant 0 : index
    %9 = vector.load %arg5[%c0_8, %c0_9] : memref<1x128xf32, #tpu.memory_space<vmem>>, vector<1x128xf32>
    %10 = vector.broadcast %9 : vector<1x128xf32> to vector<8x128xf32>
    %11 = arith.addf %8, %10 : vector<8x128xf32>
    %cst_10 = arith.constant 0.000000e+00 : f32
    %12 = vector.broadcast %cst_10 : f32 to vector<8x128xf32>
    %13 = arith.maximumf %11, %12 : vector<8x128xf32>
    %14 = arith.truncf %13 : vector<8x128xf32> to vector<8x128xbf16>
    %c0_11 = arith.constant 0 : index
    %c0_12 = arith.constant 0 : index
    %15 = vector.load %arg6[%c0_11, %c0_12] : memref<128x128xbf16, #tpu.memory_space<vmem>>, vector<128x128xbf16>
    %cst_13 = arith.constant dense<0.000000e+00> : vector<8x128xf32>
    %16 = tpu.matmul %14, %15, %cst_13 {dimension_numbers = #tpu.dot_dimension_numbers<[1], [0], [0], [1], [0, 0, 1, 1], [], []>} : vector<8x128xbf16>, vector<128x128xbf16>, vector<8x128xf32> -> vector<8x128xf32>
    %c0_14 = arith.constant 0 : index
    %c0_15 = arith.constant 0 : index
    %17 = vector.load %arg7[%c0_14, %c0_15] : memref<1x128xf32, #tpu.memory_space<vmem>>, vector<1x128xf32>
    %18 = vector.broadcast %17 : vector<1x128xf32> to vector<8x128xf32>
    %19 = arith.addf %16, %18 : vector<8x128xf32>
    %cst_16 = arith.constant 0.000000e+00 : f32
    %20 = vector.broadcast %cst_16 : f32 to vector<8x128xf32>
    %21 = arith.maximumf %19, %20 : vector<8x128xf32>
    %22 = arith.truncf %21 : vector<8x128xf32> to vector<8x128xbf16>
    %c0_17 = arith.constant 0 : index
    %c0_18 = arith.constant 0 : index
    %23 = vector.load %arg8[%c0_17, %c0_18] : memref<128x128xbf16, #tpu.memory_space<vmem>>, vector<128x128xbf16>
    %cst_19 = arith.constant dense<0.000000e+00> : vector<8x128xf32>
    %24 = tpu.matmul %22, %23, %cst_19 {dimension_numbers = #tpu.dot_dimension_numbers<[1], [0], [0], [1], [0, 0, 1, 1], [], []>} : vector<8x128xbf16>, vector<128x128xbf16>, vector<8x128xf32> -> vector<8x128xf32>
    %c0_20 = arith.constant 0 : index
    %c0_21 = arith.constant 0 : index
    %25 = vector.load %arg9[%c0_20, %c0_21] : memref<1x128xf32, #tpu.memory_space<vmem>>, vector<1x128xf32>
    %26 = vector.broadcast %25 : vector<1x128xf32> to vector<8x128xf32>
    %27 = arith.addf %24, %26 : vector<8x128xf32>
    %cst_22 = arith.constant 0.000000e+00 : f32
    %28 = vector.broadcast %cst_22 : f32 to vector<8x128xf32>
    %29 = arith.maximumf %27, %28 : vector<8x128xf32>
    %30 = arith.truncf %29 : vector<8x128xf32> to vector<8x128xbf16>
    %c0_23 = arith.constant 0 : index
    %c0_24 = arith.constant 0 : index
    %31 = vector.load %arg10[%c0_23, %c0_24] : memref<128x128xbf16, #tpu.memory_space<vmem>>, vector<128x128xbf16>
    %cst_25 = arith.constant dense<0.000000e+00> : vector<8x128xf32>
    %32 = tpu.matmul %30, %31, %cst_25 {dimension_numbers = #tpu.dot_dimension_numbers<[1], [0], [0], [1], [0, 0, 1, 1], [], []>} : vector<8x128xbf16>, vector<128x128xbf16>, vector<8x128xf32> -> vector<8x128xf32>
    %c0_26 = arith.constant 0 : index
    %c0_27 = arith.constant 0 : index
    %33 = vector.load %arg11[%c0_26, %c0_27] : memref<1x128xf32, #tpu.memory_space<vmem>>, vector<1x128xf32>
    %34 = vector.broadcast %33 : vector<1x128xf32> to vector<8x128xf32>
    %35 = arith.addf %32, %34 : vector<8x128xf32>
    %cst_28 = arith.constant 0.000000e+00 : f32
    %36 = vector.broadcast %cst_28 : f32 to vector<8x128xf32>
    %37 = arith.maximumf %35, %36 : vector<8x128xf32>
    %38 = arith.truncf %37 : vector<8x128xf32> to vector<8x128xbf16>
    %c0_29 = arith.constant 0 : index
    %c0_30 = arith.constant 0 : index
    %39 = vector.load %arg12[%c0_29, %c0_30] : memref<128x256xbf16, #tpu.memory_space<vmem>>, vector<128x256xbf16>
    %cst_31 = arith.constant dense<0.000000e+00> : vector<8x256xf32>
    %40 = tpu.matmul %38, %39, %cst_31 {dimension_numbers = #tpu.dot_dimension_numbers<[1], [0], [0], [1], [0, 0, 1, 1], [], []>} : vector<8x128xbf16>, vector<128x256xbf16>, vector<8x256xf32> -> vector<8x256xf32>
    %c0_32 = arith.constant 0 : index
    %c0_33 = arith.constant 0 : index
    %41 = vector.load %arg13[%c0_32, %c0_33] : memref<1x256xf32, #tpu.memory_space<vmem>>, vector<1x256xf32>
    %42 = vector.broadcast %41 : vector<1x256xf32> to vector<8x256xf32>
    %43 = arith.addf %40, %42 : vector<8x256xf32>
    %44 = vector.extract_strided_slice %43 {offsets = [0, 0], sizes = [8, 128], strides = [1, 1]} : vector<8x256xf32> to vector<8x128xf32>
    %45 = math.tanh %44 : vector<8x128xf32>
    %46 = vector.extract_strided_slice %43 {offsets = [0, 128], sizes = [8, 128], strides = [1, 1]} : vector<8x256xf32> to vector<8x128xf32>
    %cst_34 = arith.constant -2.000000e+01 : f32
    %cst_35 = arith.constant 0.000000e+00 : f32
    %47 = vector.broadcast %cst_34 : f32 to vector<8x128xf32>
    %48 = arith.maximumf %47, %46 : vector<8x128xf32>
    %49 = vector.broadcast %cst_35 : f32 to vector<8x128xf32>
    %50 = arith.minimumf %49, %48 : vector<8x128xf32>
    %51 = math.exp %50 : vector<8x128xf32>
    %c0_36 = arith.constant 0 : index
    %c0_37 = arith.constant 0 : index
    %52 = vector.load %arg14[%c0_36, %c0_37] : memref<8x128xf32, #tpu.memory_space<vmem>>, vector<8x128xf32>
    %53 = arith.mulf %51, %52 : vector<8x128xf32>
    %54 = arith.addf %45, %53 : vector<8x128xf32>
    %c0_38 = arith.constant 0 : index
    %c0_39 = arith.constant 0 : index
    %55 = vector.load %arg15[%c0_38, %c0_39] : memref<8x128xf32, #tpu.memory_space<vmem>>, vector<8x128xf32>
    tpu.vector_store %arg15[%c0_38, %c0_39], %54 {strides = array<i32>} : memref<8x128xf32, #tpu.memory_space<vmem>>, vector<8x128xf32>,
    %c0_40 = arith.constant 0 : index
    %c0_41 = arith.constant 0 : index
    %56 = vector.load %arg16[%c0_40, %c0_41] : memref<8x128xf32, #tpu.memory_space<vmem>>, vector<8x128xf32>
    tpu.vector_store %arg16[%c0_40, %c0_41], %45 {strides = array<i32>} : memref<8x128xf32, #tpu.memory_space<vmem>>, vector<8x128xf32>,
    %c0_42 = arith.constant 0 : index
    %c0_43 = arith.constant 0 : index
    %57 = vector.load %arg17[%c0_42, %c0_43] : memref<8x128xf32, #tpu.memory_space<vmem>>, vector<8x128xf32>
    tpu.vector_store %arg17[%c0_42, %c0_43], %51 {strides = array<i32>} : memref<8x128xf32, #tpu.memory_space<vmem>>, vector<8x128xf32>,
    return
  }
  func.func @transform_0(%arg0: i32) -> (i32, i32) {
    %c0_i32 = arith.constant 0 : i32
    %c0_i32_0 = arith.constant 0 : i32
    return %arg0, %c0_i32 : i32, i32
  }
  func.func @transform_1(%arg0: i32) -> (i32, i32) {
    %c0_i32 = arith.constant 0 : i32
    %c0_i32_0 = arith.constant 0 : i32
    %c0_i32_1 = arith.constant 0 : i32
    return %c0_i32, %c0_i32_0 : i32, i32
  }
  func.func @transform_2(%arg0: i32) -> (i32, i32) {
    %c0_i32 = arith.constant 0 : i32
    %c0_i32_0 = arith.constant 0 : i32
    %c0_i32_1 = arith.constant 0 : i32
    return %c0_i32, %c0_i32_0 : i32, i32
  }
  func.func @transform_3(%arg0: i32) -> (i32, i32) {
    %c0_i32 = arith.constant 0 : i32
    %c0_i32_0 = arith.constant 0 : i32
    %c0_i32_1 = arith.constant 0 : i32
    return %c0_i32, %c0_i32_0 : i32, i32
  }
  func.func @transform_4(%arg0: i32) -> (i32, i32) {
    %c0_i32 = arith.constant 0 : i32
    %c0_i32_0 = arith.constant 0 : i32
    %c0_i32_1 = arith.constant 0 : i32
    return %c0_i32, %c0_i32_0 : i32, i32
  }
  func.func @transform_5(%arg0: i32) -> (i32, i32) {
    %c0_i32 = arith.constant 0 : i32
    %c0_i32_0 = arith.constant 0 : i32
    %c0_i32_1 = arith.constant 0 : i32
    return %c0_i32, %c0_i32_0 : i32, i32
  }
  func.func @transform_6(%arg0: i32) -> (i32, i32) {
    %c0_i32 = arith.constant 0 : i32
    %c0_i32_0 = arith.constant 0 : i32
    %c0_i32_1 = arith.constant 0 : i32
    return %c0_i32, %c0_i32_0 : i32, i32
  }
  func.func @transform_7(%arg0: i32) -> (i32, i32) {
    %c0_i32 = arith.constant 0 : i32
    %c0_i32_0 = arith.constant 0 : i32
    %c0_i32_1 = arith.constant 0 : i32
    return %c0_i32, %c0_i32_0 : i32, i32
  }
  func.func @transform_8(%arg0: i32) -> (i32, i32) {
    %c0_i32 = arith.constant 0 : i32
    %c0_i32_0 = arith.constant 0 : i32
    %c0_i32_1 = arith.constant 0 : i32
    return %c0_i32, %c0_i32_0 : i32, i32
  }
  func.func @transform_9(%arg0: i32) -> (i32, i32) {
    %c0_i32 = arith.constant 0 : i32
    %c0_i32_0 = arith.constant 0 : i32
    %c0_i32_1 = arith.constant 0 : i32
    return %c0_i32, %c0_i32_0 : i32, i32
  }
  func.func @transform_10(%arg0: i32) -> (i32, i32) {
    %c0_i32 = arith.constant 0 : i32
    %c0_i32_0 = arith.constant 0 : i32
    %c0_i32_1 = arith.constant 0 : i32
    return %c0_i32, %c0_i32_0 : i32, i32
  }
  func.func @transform_11(%arg0: i32) -> (i32, i32) {
    %c0_i32 = arith.constant 0 : i32
    %c0_i32_0 = arith.constant 0 : i32
    %c0_i32_1 = arith.constant 0 : i32
    return %c0_i32, %c0_i32_0 : i32, i32
  }
  func.func @transform_12(%arg0: i32) -> (i32, i32) {
    %c0_i32 = arith.constant 0 : i32
    %c0_i32_0 = arith.constant 0 : i32
    %c0_i32_1 = arith.constant 0 : i32
    return %c0_i32, %c0_i32_0 : i32, i32
  }
  func.func @transform_13(%arg0: i32) -> (i32, i32) {
    %c0_i32 = arith.constant 0 : i32
    %c0_i32_0 = arith.constant 0 : i32
    return %arg0, %c0_i32 : i32, i32
  }
  func.func @transform_14(%arg0: i32) -> (i32, i32) {
    %c0_i32 = arith.constant 0 : i32
    %c0_i32_0 = arith.constant 0 : i32
    return %arg0, %c0_i32 : i32, i32
  }
  func.func @transform_15(%arg0: i32) -> (i32, i32) {
    %c0_i32 = arith.constant 0 : i32
    %c0_i32_0 = arith.constant 0 : i32
    return %arg0, %c0_i32 : i32, i32
  }
  func.func @transform_16(%arg0: i32) -> (i32, i32) {
    %c0_i32 = arith.constant 0 : i32
    %c0_i32_0 = arith.constant 0 : i32
    return %arg0, %c0_i32 : i32, i32
  }
}

</mosaic_0001>

<llo_original>
// kernel: skill_policy_forward.1
$region0: #{skill_policy_forward.1}
  #allocation0 [shape = 'u32[]', space=smem, size = 0x4, offset = 0x4, fixed_abs, tag = 'smem constant byte address 0x4 - core index']
  #allocation1 [shape = 'u32[144,128]{1,0:T(1,128)}', space=vmem, size = 0x12000, scoped, tag = 'internal scratch']
  %s0 = inlined_call_operand.vmem [shape: bf16[8,128], index: 0, kind: input, shape index: {}]
  %s1 = inlined_call_operand.vmem [shape: bf16[128,128], index: 1, kind: input, shape index: {}]
  %s2 = inlined_call_operand.vmem [shape: f32[1,128], index: 2, kind: input, shape index: {}]
  %s3 = inlined_call_operand.vmem [shape: bf16[128,128], index: 3, kind: input, shape index: {}]
  %s4 = inlined_call_operand.vmem [shape: f32[1,128], index: 4, kind: input, shape index: {}]
  %s5 = inlined_call_operand.vmem [shape: bf16[128,128], index: 5, kind: input, shape index: {}]
  %s6 = inlined_call_operand.vmem [shape: f32[1,128], index: 6, kind: input, shape index: {}]
  %s7 = inlined_call_operand.vmem [shape: bf16[128,128], index: 7, kind: input, shape index: {}]
  %s8 = inlined_call_operand.vmem [shape: f32[1,128], index: 8, kind: input, shape index: {}]
  %s9 = inlined_call_operand.vmem [shape: bf16[128,128], index: 9, kind: input, shape index: {}]
  %s10 = inlined_call_operand.vmem [shape: f32[1,128], index: 10, kind: input, shape index: {}]
  %s11 = inlined_call_operand.vmem [shape: bf16[128,256], index: 11, kind: input, shape index: {}]
  %s12 = inlined_call_operand.vmem [shape: f32[1,256], index: 12, kind: input, shape index: {}]
  %s13 = inlined_call_operand.vmem [shape: f32[8,128], index: 13, kind: input, shape index: {}]
  %s14 = inlined_call_operand.vmem [shape: f32[8,128], index: 14, kind: output, shape index: {0}]
  %s15 = inlined_call_operand.vmem [shape: f32[8,128], index: 15, kind: output, shape index: {1}]
  %s16 = inlined_call_operand.vmem [shape: f32[8,128], index: 16, kind: output, shape index: {2}]
  %17 = xla_tuple %s14, %s15, %s16
  %s18 = sld [smem:[#allocation0]]
  $region82: #{skill_policy_forward.1} parent=0
    _
  %s20 = ssub.s32 1, %s18
  %s21 = scalar_select 0, %s20, %s18
  // Predicated region
  $region2: #{skill_policy_forward.1} parent=0 // pred_check
    _
  $region3: #{skill_policy_forward.1} parent=0 // pred_check_branch
    %23 = sbr.rel (0) target = $region5
  $region4: #{skill_policy_forward.1} parent=0 // pred_region
    _
  $region5: #{skill_policy_forward.1} parent=0 // pred_fallthru
    _
  // Predicated region
  $region6: #{skill_policy_forward.1} parent=0 // pred_check
    _
  $region7: #{skill_policy_forward.1} parent=0 // pred_check_branch
    %25 = sbr.rel (0) target = $region9
  $region8: #{skill_policy_forward.1} parent=0 // pred_region
    _
  $region9: #{skill_policy_forward.1} parent=0 // pred_fallthru
    _
  // Predicated region
  $region10: #{skill_policy_forward.1} parent=0 // pred_check
    _
  $region11: #{skill_policy_forward.1} parent=0 // pred_check_branch
    %27 = sbr.rel (0) target = $region13
  $region12: #{skill_policy_forward.1} parent=0 // pred_region
    _
  $region13: #{skill_policy_forward.1} parent=0 // pred_fallthru
    _
  // Predicated region
  $region14: #{skill_policy_forward.1} parent=0 // pred_check
    _
  $region15: #{skill_policy_forward.1} parent=0 // pred_check_branch
    %29 = sbr.rel (0) target = $region17
  $region16: #{skill_policy_forward.1} parent=0 // pred_region
    _
  $region17: #{skill_policy_forward.1} parent=0 // pred_fallthru
    _
  // Predicated region
  $region18: #{skill_policy_forward.1} parent=0 // pred_check
    _
  $region19: #{skill_policy_forward.1} parent=0 // pred_check_branch
    %31 = sbr.rel (0) target = $region21
  $region20: #{skill_policy_forward.1} parent=0 // pred_region
    _
  $region21: #{skill_policy_forward.1} parent=0 // pred_fallthru
    _
  // Predicated region
  $region22: #{skill_policy_forward.1} parent=0 // pred_check
    _
  $region23: #{skill_policy_forward.1} parent=0 // pred_check_branch
    %33 = sbr.rel (0) target = $region25
  $region24: #{skill_policy_forward.1} parent=0 // pred_region
    _
  $region25: #{skill_policy_forward.1} parent=0 // pred_fallthru
    _
  // Predicated region
  $region26: #{skill_policy_forward.1} parent=0 // pred_check
    _
  $region27: #{skill_policy_forward.1} parent=0 // pred_check_branch
    %35 = sbr.rel (0) target = $region29
  $region28: #{skill_policy_forward.1} parent=0 // pred_region
    _
  $region29: #{skill_policy_forward.1} parent=0 // pred_fallthru
    _
  // Predicated region
  $region30: #{skill_policy_forward.1} parent=0 // pred_check
    _
  $region31: #{skill_policy_forward.1} parent=0 // pred_check_branch
    %37 = sbr.rel (0) target = $region33
  $region32: #{skill_policy_forward.1} parent=0 // pred_region
    _
  $region33: #{skill_policy_forward.1} parent=0 // pred_fallthru
    _
  // Predicated region
  $region34: #{skill_policy_forward.1} parent=0 // pred_check
    _
  $region35: #{skill_policy_forward.1} parent=0 // pred_check_branch
    %39 = sbr.rel (0) target = $region37
  $region36: #{skill_policy_forward.1} parent=0 // pred_region
    _
  $region37: #{skill_policy_forward.1} parent=0 // pred_fallthru
    _
  // Predicated region
  $region38: #{skill_policy_forward.1} parent=0 // pred_check
    _
  $region39: #{skill_policy_forward.1} parent=0 // pred_check_branch
    %41 = sbr.rel (0) target = $region41
  $region40: #{skill_policy_forward.1} parent=0 // pred_region
    _
  $region41: #{skill_policy_forward.1} parent=0 // pred_fallthru
    _
  // Predicated region
  $region42: #{skill_policy_forward.1} parent=0 // pred_check
    _
  $region43: #{skill_policy_forward.1} parent=0 // pred_check_branch
    %43 = sbr.rel (0) target = $region45
  $region44: #{skill_policy_forward.1} parent=0 // pred_region
    _
  $region45: #{skill_policy_forward.1} parent=0 // pred_fallthru
    _
  // Predicated region
  $region46: #{skill_policy_forward.1} parent=0 // pred_check
    _
  $region47: #{skill_policy_forward.1} parent=0 // pred_check_branch
    %45 = sbr.rel (0) target = $region49
  $region48: #{skill_policy_forward.1} parent=0 // pred_region
    _
  $region49: #{skill_policy_forward.1} parent=0 // pred_fallthru
    _
  // Predicated region
  $region50: #{skill_policy_forward.1} parent=0 // pred_check
    _
  $region51: #{skill_policy_forward.1} parent=0 // pred_check_branch
    %47 = sbr.rel (0) target = $region53
  $region52: #{skill_policy_forward.1} parent=0 // pred_region
    _
  $region53: #{skill_policy_forward.1} parent=0 // pred_fallthru
    _
  // Predicated region
  $region54: #{skill_policy_forward.1} parent=0 // pred_check
    _
  $region55: #{skill_policy_forward.1} parent=0 // pred_check_branch
    %49 = sbr.rel (0) target = $region57
  $region56: #{skill_policy_forward.1} parent=0 // pred_region
    _
  $region57: #{skill_policy_forward.1} parent=0 // pred_fallthru
    _
  %v51 = vld [vmem:[%s0] sm:$0xf]
  %v52 = vld [vmem:[%s1] sm:$0xf]
  %v53 = vld [vmem:[%s1 + $0x4] sm:$0xf]
  %v54 = vld [vmem:[%s1 + $0x8] sm:$0xf]
  %v55 = vld [vmem:[%s1 + $0xc] sm:$0xf]
  %v56 = vld [vmem:[%s1 + $0x10] sm:$0xf]
  %v57 = vld [vmem:[%s1 + $0x14] sm:$0xf]
  %v58 = vld [vmem:[%s1 + $0x18] sm:$0xf]
  %v59 = vld [vmem:[%s1 + $0x1c] sm:$0xf]
  %v60 = vld [vmem:[%s1 + $0x20] sm:$0xf]
  %v61 = vld [vmem:[%s1 + $0x24] sm:$0xf]
  %v62 = vld [vmem:[%s1 + $0x28] sm:$0xf]
  %v63 = vld [vmem:[%s1 + $0x2c] sm:$0xf]
  %v64 = vld [vmem:[%s1 + $0x30] sm:$0xf]
  %v65 = vld [vmem:[%s1 + $0x34] sm:$0xf]
  %v66 = vld [vmem:[%s1 + $0x38] sm:$0xf]
  %v67 = vld [vmem:[%s1 + $0x3c] sm:$0xf]
  %v68 = vld [vmem:[%s2] sm:$0x1]
  %v70 = vlaneseq
  %v71 = vshrl.u32 %v70, 7
  %v72 = vsub.s32 0, %v71
  %v73 = vrot.slane %v68, %v72
  %v91 = vunpack.c.l.b16 %v52
  %v92 = vunpack.c.l.b16 %v53
  %v93 = vunpack.c.l.b16 %v54
  %v94 = vunpack.c.l.b16 %v55
  %v95 = vunpack.c.l.b16 %v56
  %v96 = vunpack.c.l.b16 %v57
  %v97 = vunpack.c.l.b16 %v58
  %v98 = vunpack.c.l.b16 %v59
  %v99 = vunpack.c.l.b16 %v60
  %v100 = vunpack.c.l.b16 %v61
  %v101 = vunpack.c.l.b16 %v62
  %v102 = vunpack.c.l.b16 %v63
  %v103 = vunpack.c.l.b16 %v64
  %v104 = vunpack.c.l.b16 %v65
  %v105 = vunpack.c.l.b16 %v66
  %v106 = vunpack.c.l.b16 %v67
  %v107 = vpack.c.b16 %v92, %v91
  %v108 = vpack.c.b16 %v94, %v93
  %v109 = vpack.c.b16 %v96, %v95
  %v110 = vpack.c.b16 %v98, %v97
  %v111 = vpack.c.b16 %v100, %v99
  %v112 = vpack.c.b16 %v102, %v101
  %v113 = vpack.c.b16 %v104, %v103
  %v114 = vpack.c.b16 %v106, %v105
  %123 = vmatprep.subr.bf16.mxu0 0
  %124 = vmatpush1.bf16.msra.mxu0 %v114
  %125 = vmatprep.subr.bf16.mxu0 0
  %126 = vmatpush1.bf16.msra.mxu0 %v113
  %127 = vmatprep.subr.bf16.mxu0 0
  %128 = vmatpush1.bf16.msra.mxu0 %v112
  %129 = vmatprep.subr.bf16.mxu0 0
  %130 = vmatpush1.bf16.msra.mxu0 %v111
  %131 = vmatprep.subr.bf16.mxu0 0
  %132 = vmatpush1.bf16.msra.mxu0 %v110
  %133 = vmatprep.subr.bf16.mxu0 0
  %134 = vmatpush1.bf16.msra.mxu0 %v109
  %135 = vmatprep.subr.bf16.mxu0 0
  %136 = vmatpush1.bf16.msra.mxu0 %v108
  %137 = vmatprep.subr.bf16.mxu0 0
  %138 = vmatpush1.bf16.msra.mxu0 %v107
  %139 = vmatprep.subr.bf16.mxu0 0
  %140 = vmatpush2.bf16.msra.mxu0 0
  %141 = vmatprep.subr.bf16.mxu0 0
  %142 = vmatpush2.bf16.msra.mxu0 0
  %143 = vmatprep.subr.bf16.mxu0 0
  %144 = vmatpush2.bf16.msra.mxu0 0
  %145 = vmatprep.subr.bf16.mxu0 0
  %146 = vmatpush2.bf16.msra.mxu0 0
  %147 = vmatprep.subr.bf16.mxu0 0
  %148 = vmatpush2.bf16.msra.mxu0 0
  %149 = vmatprep.subr.bf16.mxu0 0
  %150 = vmatpush2.bf16.msra.mxu0 0
  %151 = vmatprep.subr.bf16.mxu0 0
  %152 = vmatpush2.bf16.msra.mxu0 0
  %153 = vmatprep.subr.bf16.mxu0 0
  %154 = vmatpush2.bf16.msra.mxu0 0
  %155 = vmatprep.mubr.bf16.mxu0 0
  %156 = vmatmul.mubr.bf16.gmra.mxu0 %v51
  %v157 = vpop.f32.mrf.mxu0
  %v158 = vadd.f32 %v73, %v157
  %v159 = vpop.f32.mrf.mxu0
  %v160 = vpop.f32.mrf.mxu0
  %v161 = vpop.f32.mrf.mxu0
  %162 = vdwg.mxu0
  %v163 = vpack.c.bf16 %v158, %v158
  %v164 = vld [vmem:[%s3] sm:$0xf]
  %v165 = vld [vmem:[%s3 + $0x4] sm:$0xf]
  %v166 = vld [vmem:[%s3 + $0x8] sm:$0xf]
  %v167 = vld [vmem:[%s3 + $0xc] sm:$0xf]
  %v168 = vld [vmem:[%s3 + $0x10] sm:$0xf]
  %v169 = vld [vmem:[%s3 + $0x14] sm:$0xf]
  %v170 = vld [vmem:[%s3 + $0x18] sm:$0xf]
  %v171 = vld [vmem:[%s3 + $0x1c] sm:$0xf]
  %v172 = vld [vmem:[%s3 + $0x20] sm:$0xf]
  %v173 = vld [vmem:[%s3 + $0x24] sm:$0xf]
  %v174 = vld [vmem:[%s3 + $0x28] sm:$0xf]
  %v175 = vld [vmem:[%s3 + $0x2c] sm:$0xf]
  %v176 = vld [vmem:[%s3 + $0x30] sm:$0xf]
  %v177 = vld [vmem:[%s3 + $0x34] sm:$0xf]
  %v178 = vld [vmem:[%s3 + $0x38] sm:$0xf]
  %v179 = vld [vmem:[%s3 + $0x3c] sm:$0xf]
  %v180 = vld [vmem:[%s4] sm:$0x1]
  %v182 = vlaneseq
  %v183 = vshrl.u32 %v182, 7
  %v184 = vsub.s32 0, %v183
  %v185 = vrot.slane %v180, %v184
  %v203 = vunpack.c.l.b16 %v164
  %v204 = vunpack.c.l.b16 %v165
  %v205 = vunpack.c.l.b16 %v166
  %v206 = vunpack.c.l.b16 %v167
  %v207 = vunpack.c.l.b16 %v168
  %v208 = vunpack.c.l.b16 %v169
  %v209 = vunpack.c.l.b16 %v170
  %v210 = vunpack.c.l.b16 %v171
  %v211 = vunpack.c.l.b16 %v172
  %v212 = vunpack.c.l.b16 %v173
  %v213 = vunpack.c.l.b16 %v174
  %v214 = vunpack.c.l.b16 %v175
  %v215 = vunpack.c.l.b16 %v176
  %v216 = vunpack.c.l.b16 %v177
  %v217 = vunpack.c.l.b16 %v178
  %v218 = vunpack.c.l.b16 %v179
  %v219 = vpack.c.b16 %v204, %v203
  %v220 = vpack.c.b16 %v206, %v205
  %v221 = vpack.c.b16 %v208, %v207
  %v222 = vpack.c.b16 %v210, %v209
  %v223 = vpack.c.b16 %v212, %v211
  %v224 = vpack.c.b16 %v214, %v213
  %v225 = vpack.c.b16 %v216, %v215
  %v226 = vpack.c.b16 %v218, %v217
  %235 = vmatprep.subr.bf16.mxu0 0
  %236 = vmatpush1.bf16.msra.mxu0 %v226
  %237 = vmatprep.subr.bf16.mxu0 0
  %238 = vmatpush1.bf16.msra.mxu0 %v225
  %239 = vmatprep.subr.bf16.mxu0 0
  %240 = vmatpush1.bf16.msra.mxu0 %v224
  %241 = vmatprep.subr.bf16.mxu0 0
  %242 = vmatpush1.bf16.msra.mxu0 %v223
  %243 = vmatprep.subr.bf16.mxu0 0
  %244 = vmatpush1.bf16.msra.mxu0 %v222
  %245 = vmatprep.subr.bf16.mxu0 0
  %246 = vmatpush1.bf16.msra.mxu0 %v221
  %247 = vmatprep.subr.bf16.mxu0 0
  %248 = vmatpush1.bf16.msra.mxu0 %v220
  %249 = vmatprep.subr.bf16.mxu0 0
  %250 = vmatpush1.bf16.msra.mxu0 %v219
  %251 = vmatprep.subr.bf16.mxu0 0
  %252 = vmatpush2.bf16.msra.mxu0 0
  %253 = vmatprep.subr.bf16.mxu0 0
  %254 = vmatpush2.bf16.msra.mxu0 0
  %255 = vmatprep.subr.bf16.mxu0 0
  %256 = vmatpush2.bf16.msra.mxu0 0
  %257 = vmatprep.subr.bf16.mxu0 0
  %258 = vmatpush2.bf16.msra.mxu0 0
  %259 = vmatprep.subr.bf16.mxu0 0
  %260 = vmatpush2.bf16.msra.mxu0 0
  %261 = vmatprep.subr.bf16.mxu0 0
  %262 = vmatpush2.bf16.msra.mxu0 0
  %263 = vmatprep.subr.bf16.mxu0 0
  %264 = vmatpush2.bf16.msra.mxu0 0
  %265 = vmatprep.subr.bf16.mxu0 0
  %266 = vmatpush2.bf16.msra.mxu0 0
  %267 = vmatprep.mubr.bf16.mxu0 0
  %268 = vmatmul.mubr.bf16.gmra.mxu0 %v163
  %v269 = vpop.f32.mrf.mxu0
  %v270 = vadd.f32 %v185, %v269
  %v271 = vpop.f32.mrf.mxu0
  %v272 = vpop.f32.mrf.mxu0
  %v273 = vpop.f32.mrf.mxu0
  %274 = vdwg.mxu0
  %v275 = vmax.f32 %v270, 0.0
  %v276 = vpack.c.bf16 %v275, %v275
  %v277 = vld [vmem:[%s5] sm:$0xf]
  %v278 = vld [vmem:[%s5 + $0x4] sm:$0xf]
  %v279 = vld [vmem:[%s5 + $0x8] sm:$0xf]
  %v280 = vld [vmem:[%s5 + $0xc] sm:$0xf]
  %v281 = vld [vmem:[%s5 + $0x10] sm:$0xf]
  %v282 = vld [vmem:[%s5 + $0x14] sm:$0xf]
  %v283 = vld [vmem:[%s5 + $0x18] sm:$0xf]
  %v284 = vld [vmem:[%s5 + $0x1c] sm:$0xf]
  %v285 = vld [vmem:[%s5 + $0x20] sm:$0xf]
  %v286 = vld [vmem:[%s5 + $0x24] sm:$0xf]
  %v287 = vld [vmem:[%s5 + $0x28] sm:$0xf]
  %v288 = vld [vmem:[%s5 + $0x2c] sm:$0xf]
  %v289 = vld [vmem:[%s5 + $0x30] sm:$0xf]
  %v290 = vld [vmem:[%s5 + $0x34] sm:$0xf]
  %v291 = vld [vmem:[%s5 + $0x38] sm:$0xf]
  %v292 = vld [vmem:[%s5 + $0x3c] sm:$0xf]
  %v293 = vld [vmem:[%s6] sm:$0x1]
  %v295 = vlaneseq
  %v296 = vshrl.u32 %v295, 7
  %v297 = vsub.s32 0, %v296
  %v298 = vrot.slane %v293, %v297
  %v316 = vunpack.c.l.b16 %v277
  %v317 = vunpack.c.l.b16 %v278
  %v318 = vunpack.c.l.b16 %v279
  %v319 = vunpack.c.l.b16 %v280
  %v320 = vunpack.c.l.b16 %v281
  %v321 = vunpack.c.l.b16 %v282
  %v322 = vunpack.c.l.b16 %v283
  %v323 = vunpack.c.l.b16 %v284
  %v324 = vunpack.c.l.b16 %v285
  %v325 = vunpack.c.l.b16 %v286
  %v326 = vunpack.c.l.b16 %v287
  %v327 = vunpack.c.l.b16 %v288
  %v328 = vunpack.c.l.b16 %v289
  %v329 = vunpack.c.l.b16 %v290
  %v330 = vunpack.c.l.b16 %v291
  %v331 = vunpack.c.l.b16 %v292
  %v332 = vpack.c.b16 %v317, %v316
  %v333 = vpack.c.b16 %v319, %v318
  %v334 = vpack.c.b16 %v321, %v320
  %v335 = vpack.c.b16 %v323, %v322
  %v336 = vpack.c.b16 %v325, %v324
  %v337 = vpack.c.b16 %v327, %v326
  %v338 = vpack.c.b16 %v329, %v328
  %v339 = vpack.c.b16 %v331, %v330
  %348 = vmatprep.subr.bf16.mxu0 0
  %349 = vmatpush1.bf16.msra.mxu0 %v339
  %350 = vmatprep.subr.bf16.mxu0 0
  %351 = vmatpush1.bf16.msra.mxu0 %v338
  %352 = vmatprep.subr.bf16.mxu0 0
  %353 = vmatpush1.bf16.msra.mxu0 %v337
  %354 = vmatprep.subr.bf16.mxu0 0
  %355 = vmatpush1.bf16.msra.mxu0 %v336
  %356 = vmatprep.subr.bf16.mxu0 0
  %357 = vmatpush1.bf16.msra.mxu0 %v335
  %358 = vmatprep.subr.bf16.mxu0 0
  %359 = vmatpush1.bf16.msra.mxu0 %v334
  %360 = vmatprep.subr.bf16.mxu0 0
  %361 = vmatpush1.bf16.msra.mxu0 %v333
  %362 = vmatprep.subr.bf16.mxu0 0
  %363 = vmatpush1.bf16.msra.mxu0 %v332
  %364 = vmatprep.subr.bf16.mxu0 0
  %365 = vmatpush2.bf16.msra.mxu0 0
  %366 = vmatprep.subr.bf16.mxu0 0
  %367 = vmatpush2.bf16.msra.mxu0 0
  %368 = vmatprep.subr.bf16.mxu0 0
  %369 = vmatpush2.bf16.msra.mxu0 0
  %370 = vmatprep.subr.bf16.mxu0 0
  %371 = vmatpush2.bf16.msra.mxu0 0
  %372 = vmatprep.subr.bf16.mxu0 0
  %373 = vmatpush2.bf16.msra.mxu0 0
  %374 = vmatprep.subr.bf16.mxu0 0
  %375 = vmatpush2.bf16.msra.mxu0 0
  %376 = vmatprep.subr.bf16.mxu0 0
  %377 = vmatpush2.bf16.msra.mxu0 0
  %378 = vmatprep.subr.bf16.mxu0 0
  %379 = vmatpush2.bf16.msra.mxu0 0
  %380 = vmatprep.mubr.bf16.mxu0 0
  %381 = vmatmul.mubr.bf16.gmra.mxu0 %v276
  %v382 = vpop.f32.mrf.mxu0
  %v383 = vadd.f32 %v298, %v382
  %v384 = vpop.f32.mrf.mxu0
  %v385 = vpop.f32.mrf.mxu0
  %v386 = vpop.f32.mrf.mxu0
  %387 = vdwg.mxu0
  %v388 = vmax.f32 %v383, 0.0
  %v389 = vpack.c.bf16 %v388, %v388
  %v390 = vld [vmem:[%s7] sm:$0xf]
  %v391 = vld [vmem:[%s7 + $0x4] sm:$0xf]
  %v392 = vld [vmem:[%s7 + $0x8] sm:$0xf]
  %v393 = vld [vmem:[%s7 + $0xc] sm:$0xf]
  %v394 = vld [vmem:[%s7 + $0x10] sm:$0xf]
  %v395 = vld [vmem:[%s7 + $0x14] sm:$0xf]
  %v396 = vld [vmem:[%s7 + $0x18] sm:$0xf]
  %v397 = vld [vmem:[%s7 + $0x1c] sm:$0xf]
  %v398 = vld [vmem:[%s7 + $0x20] sm:$0xf]
  %v399 = vld [vmem:[%s7 + $0x24] sm:$0xf]
  %v400 = vld [vmem:[%s7 + $0x28] sm:$0xf]
  %v401 = vld [vmem:[%s7 + $0x2c] sm:$0xf]
  %v402 = vld [vmem:[%s7 + $0x30] sm:$0xf]
  %v403 = vld [vmem:[%s7 + $0x34] sm:$0xf]
  %v404 = vld [vmem:[%s7 + $0x38] sm:$0xf]
  %v405 = vld [vmem:[%s7 + $0x3c] sm:$0xf]
  %v406 = vld [vmem:[%s8] sm:$0x1]
  %v408 = vlaneseq
  %v409 = vshrl.u32 %v408, 7
  %v410 = vsub.s32 0, %v409
  %v411 = vrot.slane %v406, %v410
  %v429 = vunpack.c.l.b16 %v390
  %v430 = vunpack.c.l.b16 %v391
  %v431 = vunpack.c.l.b16 %v392
  %v432 = vunpack.c.l.b16 %v393
  %v433 = vunpack.c.l.b16 %v394
  %v434 = vunpack.c.l.b16 %v395
  %v435 = vunpack.c.l.b16 %v396
  %v436 = vunpack.c.l.b16 %v397
  %v437 = vunpack.c.l.b16 %v398
  %v438 = vunpack.c.l.b16 %v399
  %v439 = vunpack.c.l.b16 %v400
  %v440 = vunpack.c.l.b16 %v401
  %v441 = vunpack.c.l.b16 %v402
  %v442 = vunpack.c.l.b16 %v403
  %v443 = vunpack.c.l.b16 %v404
  %v444 = vunpack.c.l.b16 %v405
  %v445 = vpack.c.b16 %v430, %v429
  %v446 = vpack.c.b16 %v432, %v431
  %v447 = vpack.c.b16 %v434, %v433
  %v448 = vpack.c.b16 %v436, %v435
  %v449 = vpack.c.b16 %v438, %v437
  %v450 = vpack.c.b16 %v440, %v439
  %v451 = vpack.c.b16 %v442, %v441
  %v452 = vpack.c.b16 %v444, %v443
  %461 = vmatprep.subr.bf16.mxu0 0
  %462 = vmatpush1.bf16.msra.mxu0 %v452
  %463 = vmatprep.subr.bf16.mxu0 0
  %464 = vmatpush1.bf16.msra.mxu0 %v451
  %465 = vmatprep.subr.bf16.mxu0 0
  %466 = vmatpush1.bf16.msra.mxu0 %v450
  %467 = vmatprep.subr.bf16.mxu0 0
  %468 = vmatpush1.bf16.msra.mxu0 %v449
  %469 = vmatprep.subr.bf16.mxu0 0
  %470 = vmatpush1.bf16.msra.mxu0 %v448
  %471 = vmatprep.subr.bf16.mxu0 0
  %472 = vmatpush1.bf16.msra.mxu0 %v447
  %473 = vmatprep.subr.bf16.mxu0 0
  %474 = vmatpush1.bf16.msra.mxu0 %v446
  %475 = vmatprep.subr.bf16.mxu0 0
  %476 = vmatpush1.bf16.msra.mxu0 %v445
  %477 = vmatprep.subr.bf16.mxu0 0
  %478 = vmatpush2.bf16.msra.mxu0 0
  %479 = vmatprep.subr.bf16.mxu0 0
  %480 = vmatpush2.bf16.msra.mxu0 0
  %481 = vmatprep.subr.bf16.mxu0 0
  %482 = vmatpush2.bf16.msra.mxu0 0
  %483 = vmatprep.subr.bf16.mxu0 0
  %484 = vmatpush2.bf16.msra.mxu0 0
  %485 = vmatprep.subr.bf16.mxu0 0
  %486 = vmatpush2.bf16.msra.mxu0 0
  %487 = vmatprep.subr.bf16.mxu0 0
  %488 = vmatpush2.bf16.msra.mxu0 0
  %489 = vmatprep.subr.bf16.mxu0 0
  %490 = vmatpush2.bf16.msra.mxu0 0
  %491 = vmatprep.subr.bf16.mxu0 0
  %492 = vmatpush2.bf16.msra.mxu0 0
  %493 = vmatprep.mubr.bf16.mxu0 0
  %494 = vmatmul.mubr.bf16.gmra.mxu0 %v389
  %v495 = vpop.f32.mrf.mxu0
  %v496 = vadd.f32 %v411, %v495
  %v497 = vpop.f32.mrf.mxu0
  %v498 = vpop.f32.mrf.mxu0
  %v499 = vpop.f32.mrf.mxu0
  %500 = vdwg.mxu0
  %v501 = vmax.f32 %v496, 0.0
  %v502 = vpack.c.bf16 %v501, %v501
  %v503 = vld [vmem:[%s9] sm:$0xf]
  %v504 = vld [vmem:[%s9 + $0x4] sm:$0xf]
  %v505 = vld [vmem:[%s9 + $0x8] sm:$0xf]
  %v506 = vld [vmem:[%s9 + $0xc] sm:$0xf]
  %v507 = vld [vmem:[%s9 + $0x10] sm:$0xf]
  %v508 = vld [vmem:[%s9 + $0x14] sm:$0xf]
  %v509 = vld [vmem:[%s9 + $0x18] sm:$0xf]
  %v510 = vld [vmem:[%s9 + $0x1c] sm:$0xf]
  %v511 = vld [vmem:[%s9 + $0x20] sm:$0xf]
  %v512 = vld [vmem:[%s9 + $0x24] sm:$0xf]
  %v513 = vld [vmem:[%s9 + $0x28] sm:$0xf]
  %v514 = vld [vmem:[%s9 + $0x2c] sm:$0xf]
  %v515 = vld [vmem:[%s9 + $0x30] sm:$0xf]
  %v516 = vld [vmem:[%s9 + $0x34] sm:$0xf]
  %v517 = vld [vmem:[%s9 + $0x38] sm:$0xf]
  %v518 = vld [vmem:[%s9 + $0x3c] sm:$0xf]
  %v519 = vld [vmem:[%s10] sm:$0x1]
  %v521 = vlaneseq
  %v522 = vshrl.u32 %v521, 7
  %v523 = vsub.s32 0, %v522
  %v524 = vrot.slane %v519, %v523
  %v542 = vunpack.c.l.b16 %v503
  %v543 = vunpack.c.l.b16 %v504
  %v544 = vunpack.c.l.b16 %v505
  %v545 = vunpack.c.l.b16 %v506
  %v546 = vunpack.c.l.b16 %v507
  %v547 = vunpack.c.l.b16 %v508
  %v548 = vunpack.c.l.b16 %v509
  %v549 = vunpack.c.l.b16 %v510
  %v550 = vunpack.c.l.b16 %v511
  %v551 = vunpack.c.l.b16 %v512
  %v552 = vunpack.c.l.b16 %v513
  %v553 = vunpack.c.l.b16 %v514
  %v554 = vunpack.c.l.b16 %v515
  %v555 = vunpack.c.l.b16 %v516
  %v556 = vunpack.c.l.b16 %v517
  %v557 = vunpack.c.l.b16 %v518
  %v558 = vpack.c.b16 %v543, %v542
  %v559 = vpack.c.b16 %v545, %v544
  %v560 = vpack.c.b16 %v547, %v546
  %v561 = vpack.c.b16 %v549, %v548
  %v562 = vpack.c.b16 %v551, %v550
  %v563 = vpack.c.b16 %v553, %v552
  %v564 = vpack.c.b16 %v555, %v554
  %v565 = vpack.c.b16 %v557, %v556
  %574 = vmatprep.subr.bf16.mxu0 0
  %575 = vmatpush1.bf16.msra.mxu0 %v565
  %576 = vmatprep.subr.bf16.mxu0 0
  %577 = vmatpush1.bf16.msra.mxu0 %v564
  %578 = vmatprep.subr.bf16.mxu0 0
  %579 = vmatpush1.bf16.msra.mxu0 %v563
  %580 = vmatprep.subr.bf16.mxu0 0
  %581 = vmatpush1.bf16.msra.mxu0 %v562
  %582 = vmatprep.subr.bf16.mxu0 0
  %583 = vmatpush1.bf16.msra.mxu0 %v561
  %584 = vmatprep.subr.bf16.mxu0 0
  %585 = vmatpush1.bf16.msra.mxu0 %v560
  %586 = vmatprep.subr.bf16.mxu0 0
  %587 = vmatpush1.bf16.msra.mxu0 %v559
  %588 = vmatprep.subr.bf16.mxu0 0
  %589 = vmatpush1.bf16.msra.mxu0 %v558
  %590 = vmatprep.subr.bf16.mxu0 0
  %591 = vmatpush2.bf16.msra.mxu0 0
  %592 = vmatprep.subr.bf16.mxu0 0
  %593 = vmatpush2.bf16.msra.mxu0 0
  %594 = vmatprep.subr.bf16.mxu0 0
  %595 = vmatpush2.bf16.msra.mxu0 0
  %596 = vmatprep.subr.bf16.mxu0 0
  %597 = vmatpush2.bf16.msra.mxu0 0
  %598 = vmatprep.subr.bf16.mxu0 0
  %599 = vmatpush2.bf16.msra.mxu0 0
  %600 = vmatprep.subr.bf16.mxu0 0
  %601 = vmatpush2.bf16.msra.mxu0 0
  %602 = vmatprep.subr.bf16.mxu0 0
  %603 = vmatpush2.bf16.msra.mxu0 0
  %604 = vmatprep.subr.bf16.mxu0 0
  %605 = vmatpush2.bf16.msra.mxu0 0
  %606 = vmatprep.mubr.bf16.mxu0 0
  %607 = vmatmul.mubr.bf16.gmra.mxu0 %v502
  %v608 = vpop.f32.mrf.mxu0
  %v609 = vadd.f32 %v524, %v608
  %v610 = vpop.f32.mrf.mxu0
  %v611 = vpop.f32.mrf.mxu0
  %v612 = vpop.f32.mrf.mxu0
  %613 = vdwg.mxu0
  %v614 = vmax.f32 %v609, 0.0
  %v615 = vpack.c.bf16 %v614, %v614
  %v616 = vld [vmem:[%s11] sm:$0xff]
  %v617 = vld [vmem:[%s11 + $0x8] sm:$0xff]
  %v618 = vld [vmem:[%s11 + $0x10] sm:$0xff]
  %v619 = vld [vmem:[%s11 + $0x18] sm:$0xff]
  %v620 = vld [vmem:[%s11 + $0x20] sm:$0xff]
  %v621 = vld [vmem:[%s11 + $0x28] sm:$0xff]
  %v622 = vld [vmem:[%s11 + $0x30] sm:$0xff]
  %v623 = vld [vmem:[%s11 + $0x38] sm:$0xff]
  %v624 = vld [vmem:[%s11 + $0x40] sm:$0xff]
  %v625 = vld [vmem:[%s11 + $0x48] sm:$0xff]
  %v626 = vld [vmem:[%s11 + $0x50] sm:$0xff]
  %v627 = vld [vmem:[%s11 + $0x58] sm:$0xff]
  %v628 = vld [vmem:[%s11 + $0x60] sm:$0xff]
  %v629 = vld [vmem:[%s11 + $0x68] sm:$0xff]
  %v630 = vld [vmem:[%s11 + $0x70] sm:$0xff]
  %v631 = vld [vmem:[%s11 + $0x78] sm:$0xff]
  %v632 = vld [vmem:[%s12] sm:$0x3]
  %v634 = vlaneseq
  %v635 = vshrl.u32 %v634, 7
  %v636 = vsub.s32 0, %v635
  %v637 = vrot.slane %v632, %v636
  %v638 = vlaneseq
  %v639 = vshrl.u32 %v638, 7
  %v640 = vsub.s32 1, %v639
  %v641 = vrot.slane %v632, %v640
  %v660 = vunpack.c.l.b16 %v616
  %v661 = vunpack.c.h.b16 %v616
  %v662 = vunpack.c.l.b16 %v617
  %v663 = vunpack.c.h.b16 %v617
  %v664 = vunpack.c.l.b16 %v618
  %v665 = vunpack.c.h.b16 %v618
  %v666 = vunpack.c.l.b16 %v619
  %v667 = vunpack.c.h.b16 %v619
  %v668 = vunpack.c.l.b16 %v620
  %v669 = vunpack.c.h.b16 %v620
  %v670 = vunpack.c.l.b16 %v621
  %v671 = vunpack.c.h.b16 %v621
  %v672 = vunpack.c.l.b16 %v622
  %v673 = vunpack.c.h.b16 %v622
  %v674 = vunpack.c.l.b16 %v623
  %v675 = vunpack.c.h.b16 %v623
  %v676 = vunpack.c.l.b16 %v624
  %v677 = vunpack.c.h.b16 %v624
  %v678 = vunpack.c.l.b16 %v625
  %v679 = vunpack.c.h.b16 %v625
  %v680 = vunpack.c.l.b16 %v626
  %v681 = vunpack.c.h.b16 %v626
  %v682 = vunpack.c.l.b16 %v627
  %v683 = vunpack.c.h.b16 %v627
  %v684 = vunpack.c.l.b16 %v628
  %v685 = vunpack.c.h.b16 %v628
  %v686 = vunpack.c.l.b16 %v629
  %v687 = vunpack.c.h.b16 %v629
  %v688 = vunpack.c.l.b16 %v630
  %v689 = vunpack.c.h.b16 %v630
  %v690 = vunpack.c.l.b16 %v631
  %v691 = vunpack.c.h.b16 %v631
  %v692 = vpack.c.b16 %v662, %v660
  %v693 = vpack.c.b16 %v663, %v661
  %v694 = vpack.c.b16 %v666, %v664
  %v695 = vpack.c.b16 %v667, %v665
  %v696 = vpack.c.b16 %v670, %v668
  %v697 = vpack.c.b16 %v671, %v669
  %v698 = vpack.c.b16 %v674, %v672
  %v699 = vpack.c.b16 %v675, %v673
  %v700 = vpack.c.b16 %v678, %v676
  %v701 = vpack.c.b16 %v679, %v677
  %v702 = vpack.c.b16 %v682, %v680
  %v703 = vpack.c.b16 %v683, %v681
  %v704 = vpack.c.b16 %v686, %v684
  %v705 = vpack.c.b16 %v687, %v685
  %v706 = vpack.c.b16 %v690, %v688
  %v707 = vpack.c.b16 %v691, %v689
  %724 = vmatprep.subr.bf16.mxu0 %v707
  %725 = vmatpush1.bf16.msra.mxu0 %v706
  %726 = vmatprep.subr.bf16.mxu0 %v705
  %727 = vmatpush1.bf16.msra.mxu0 %v704
  %728 = vmatprep.subr.bf16.mxu0 %v703
  %729 = vmatpush1.bf16.msra.mxu0 %v702
  %730 = vmatprep.subr.bf16.mxu0 %v701
  %731 = vmatpush1.bf16.msra.mxu0 %v700
  %732 = vmatprep.subr.bf16.mxu0 %v699
  %733 = vmatpush1.bf16.msra.mxu0 %v698
  %734 = vmatprep.subr.bf16.mxu0 %v697
  %735 = vmatpush1.bf16.msra.mxu0 %v696
  %736 = vmatprep.subr.bf16.mxu0 %v695
  %737 = vmatpush1.bf16.msra.mxu0 %v694
  %738 = vmatprep.subr.bf16.mxu0 %v693
  %739 = vmatpush1.bf16.msra.mxu0 %v692
  %740 = vmatprep.subr.bf16.mxu0 0
  %741 = vmatpush2.bf16.msra.mxu0 0
  %742 = vmatprep.subr.bf16.mxu0 0
  %743 = vmatpush2.bf16.msra.mxu0 0
  %744 = vmatprep.subr.bf16.mxu0 0
  %745 = vmatpush2.bf16.msra.mxu0 0
  %746 = vmatprep.subr.bf16.mxu0 0
  %747 = vmatpush2.bf16.msra.mxu0 0
  %748 = vmatprep.subr.bf16.mxu0 0
  %749 = vmatpush2.bf16.msra.mxu0 0
  %750 = vmatprep.subr.bf16.mxu0 0
  %751 = vmatpush2.bf16.msra.mxu0 0
  %752 = vmatprep.subr.bf16.mxu0 0
  %753 = vmatpush2.bf16.msra.mxu0 0
  %754 = vmatprep.subr.bf16.mxu0 0
  %755 = vmatpush2.bf16.msra.mxu0 0
  %756 = vmatprep.mubr.bf16.mxu0 0
  %757 = vmatmul.mubr.bf16.gmra.mxu0 %v615
  %v758 = vpop.f32.mrf.mxu0
  %v759 = vadd.f32 %v637, %v758
  %v760 = vpop.f32.mrf.mxu0
  %v761 = vadd.f32 %v641, %v760
  %v762 = vpop.f32.mrf.mxu0
  %v763 = vpop.f32.mrf.mxu0
  %764 = vdwg.mxu0
  %v765 = vtanh.pop %v759
  %v766 = vmax.f32 %v761, -20.0
  %v767 = vmin.f32 %v766, 0.0
  %v768 = vmul.f32 %v767, 1.442695
  %v769 = vpow.pop %v768
  %v770 = vld [vmem:[%s13] sm:$0xff]
  %v771 = vmul.f32 %v769, %v770
  %v772 = vadd.f32 %v765, %v771
  %773 = vst [vmem:[%s14] sm:$0xff] %v772
  %774 = vst [vmem:[%s15] sm:$0xff] %v765
  %775 = vst [vmem:[%s16] sm:$0xff] %v769
  // Predicated region
  $region58: #{skill_policy_forward.1} parent=0 // pred_check
    _
  $region59: #{skill_policy_forward.1} parent=0 // pred_check_branch
    %777 = sbr.rel (0) target = $region61
  $region60: #{skill_policy_forward.1} parent=0 // pred_region
    _
  $region61: #{skill_policy_forward.1} parent=0 // pred_fallthru
    _
  // Predicated region
  $region62: #{skill_policy_forward.1} parent=0 // pred_check
    _
  $region63: #{skill_policy_forward.1} parent=0 // pred_check_branch
    %779 = sbr.rel (0) target = $region65
  $region64: #{skill_policy_forward.1} parent=0 // pred_region
    _
  $region65: #{skill_policy_forward.1} parent=0 // pred_fallthru
    _
  // Predicated region
  $region66: #{skill_policy_forward.1} parent=0 // pred_check
    _
  $region67: #{skill_policy_forward.1} parent=0 // pred_check_branch
    %781 = sbr.rel (0) target = $region69
  $region68: #{skill_policy_forward.1} parent=0 // pred_region
    _
  $region69: #{skill_policy_forward.1} parent=0 // pred_fallthru
    _
  // Predicated region
  $region70: #{skill_policy_forward.1} parent=0 // pred_check
    _
  $region71: #{skill_policy_forward.1} parent=0 // pred_check_branch
    %783 = sbr.rel (0) target = $region73
  $region72: #{skill_policy_forward.1} parent=0 // pred_region
    _
  $region73: #{skill_policy_forward.1} parent=0 // pred_fallthru
    _
  // Predicated region
  $region74: #{skill_policy_forward.1} parent=0 // pred_check
    _
  $region75: #{skill_policy_forward.1} parent=0 // pred_check_branch
    %785 = sbr.rel (0) target = $region77
  $region76: #{skill_policy_forward.1} parent=0 // pred_region
    _
  $region77: #{skill_policy_forward.1} parent=0 // pred_fallthru
    _
  // Predicated region
  $region78: #{skill_policy_forward.1} parent=0 // pred_check
    _
  $region79: #{skill_policy_forward.1} parent=0 // pred_check_branch
    %787 = sbr.rel (0) target = $region81
  $region80: #{skill_policy_forward.1} parent=0 // pred_region
    _
  $region81: #{skill_policy_forward.1} parent=0 // pred_fallthru
    _

</llo_original>
